<compile_context>
chip_gen: v7x
topology: tpu7x:2x2x1
jax: 0.10.0
libtpu: 0.0.40
codegen_flags: <defaults>
</compile_context>

<pallas_src>
import math
import functools

import jax
import jax.numpy as jnp
from jax import lax
from jax.experimental import pallas as pl
from jax.experimental.pallas import tpu as pltpu


def _causal_attn_kernel(x_ref, wq_ref, wk_ref, wv_ref, bq_ref, bk_ref, bv_ref,
                        wproj_ref, bproj_ref, y_ref, att_ref, acc_ref, *, scale):
    """One grid step = (batch b, head h).

    x_ref    : (1, T, C)    bf16  (resident across the head axis)
    wq/k/v   : (1, C, hd)   bf16  per-head projection weights
    bq/k/v   : (1, 1, hd)   f32
    wproj_ref: (1, hd, C)   bf16  per-head slice (rows) of the output projection
    bproj_ref: (1, C)       f32
    y_ref    : (1, T, C)    f32 out (accumulated over heads via acc_ref)
    att_ref  : (1, 1, T, T) f32 out
    acc_ref  : (T, C)       f32 VMEM scratch
    """
    h = pl.program_id(1)
    x = x_ref[0]                                    # (T, C) bf16
    T = x.shape[0]

    # Initialize the output accumulator with the projection bias on the first head.
    @pl.when(h == 0)
    def _():
        acc_ref[...] = jnp.broadcast_to(bproj_ref[...], acc_ref.shape)

    # Per-head q/k/v projections: bf16 MXU matmuls with f32 accumulation.
    q = jnp.dot(x, wq_ref[0], preferred_element_type=jnp.float32) + bq_ref[0]   # (T, hd)
    k = jnp.dot(x, wk_ref[0], preferred_element_type=jnp.float32) + bk_ref[0]   # (T, hd)
    v = jnp.dot(x, wv_ref[0], preferred_element_type=jnp.float32) + bv_ref[0]   # (T, hd)

    # Scores: contract the head dim directly (no materialized k transpose).
    s = lax.dot_general(q.astype(jnp.bfloat16), k.astype(jnp.bfloat16),
                        dimension_numbers=(((1,), (1,)), ((), ())),
                        preferred_element_type=jnp.float32) * scale             # (T, T)

    # Causal mask via 2-D iota; large finite negative avoids NaN if a row were
    # ever fully masked (padding reuse).
    row = lax.broadcasted_iota(jnp.int32, (T, T), 0)
    col = lax.broadcasted_iota(jnp.int32, (T, T), 1)
    s = jnp.where(row >= col, s, -1e30)

    # Numerically-stable f32 softmax; the divide goes to the EUP (approx reciprocal).
    m = jnp.max(s, axis=-1, keepdims=True)
    p = jnp.exp(s - m)
    att = p * pl.reciprocal(jnp.sum(p, axis=-1, keepdims=True), approx=True)    # (T, T)

    att_ref[0, 0] = att

    # y_h = att @ v_h, folded straight into the output projection:
    #   acc += (att @ v_h) @ W_proj[h*hd:(h+1)*hd, :]
    # which keeps every accumulate/store lane-dense (T, C) -- no concatenate of
    # sub-128-lane head chunks.
    yh = jnp.dot(att.astype(jnp.bfloat16), v.astype(jnp.bfloat16),
                 preferred_element_type=jnp.float32)                            # (T, hd)
    acc_ref[...] += jnp.dot(yh.astype(jnp.bfloat16), wproj_ref[0],
                            preferred_element_type=jnp.float32)                 # (T, C)

    @pl.when(h == pl.num_programs(1) - 1)
    def _():
        y_ref[0] = acc_ref[...].astype(y_ref.dtype)


def causal_self_attention(x, w_attn, b_attn, w_proj, b_proj, n_head):
    """x: (B, T, C) float32. Returns (y, att) like the PyTorch module."""
    B, T, C = x.shape
    assert C % n_head == 0
    hd = C // n_head
    scale = 1.0 / math.sqrt(hd)

    # Wrapper-side (free) layout plumbing: head-contiguous weight slices.
    #   wq/wk/wv : (n_head, C, hd)   columns of c_attn grouped per head
    #   wproj_h  : (n_head, hd, C)   rows of c_proj grouped per head
    wq, wk, wv = jnp.split(w_attn, 3, axis=1)
    wq = wq.reshape(C, n_head, hd).transpose(1, 0, 2).astype(jnp.bfloat16)
    wk = wk.reshape(C, n_head, hd).transpose(1, 0, 2).astype(jnp.bfloat16)
    wv = wv.reshape(C, n_head, hd).transpose(1, 0, 2).astype(jnp.bfloat16)
    bq, bk, bv = jnp.split(b_attn, 3)
    bq = bq.reshape(n_head, 1, hd).astype(jnp.float32)
    bk = bk.reshape(n_head, 1, hd).astype(jnp.float32)
    bv = bv.reshape(n_head, 1, hd).astype(jnp.float32)
    wproj_h = w_proj.reshape(n_head, hd, C).astype(jnp.bfloat16)
    bproj2 = b_proj.reshape(1, C).astype(jnp.float32)
    x_bf16 = x.astype(jnp.bfloat16)

    kernel = functools.partial(_causal_attn_kernel, scale=scale)

    y, att = pl.pallas_call(
        kernel,
        out_shape=(
            jax.ShapeDtypeStruct((B, T, C), jnp.float32),
            jax.ShapeDtypeStruct((B, n_head, T, T), jnp.float32),
        ),
        grid=(B, n_head),
        in_specs=[
            pl.BlockSpec((1, T, C), lambda b, h: (b, 0, 0)),        # x (per-batch tile)
            pl.BlockSpec((1, C, hd), lambda b, h: (h, 0, 0)),       # wq (per-head)
            pl.BlockSpec((1, C, hd), lambda b, h: (h, 0, 0)),       # wk
            pl.BlockSpec((1, C, hd), lambda b, h: (h, 0, 0)),       # wv
            pl.BlockSpec((1, 1, hd), lambda b, h: (h, 0, 0)),       # bq
            pl.BlockSpec((1, 1, hd), lambda b, h: (h, 0, 0)),       # bk
            pl.BlockSpec((1, 1, hd), lambda b, h: (h, 0, 0)),       # bv
            pl.BlockSpec((1, hd, C), lambda b, h: (h, 0, 0)),       # W_proj head slice
            pl.BlockSpec((1, C), lambda b, h: (0, 0)),              # b_proj
        ],
        out_specs=(
            pl.BlockSpec((1, T, C), lambda b, h: (b, 0, 0)),        # y (resident over heads)
            pl.BlockSpec((1, 1, T, T), lambda b, h: (b, h, 0, 0)),  # attention weights
        ),
        scratch_shapes=[pltpu.VMEM((T, C), jnp.float32)],
        compiler_params=pltpu.CompilerParams(
            dimension_semantics=("parallel", "arbitrary"),
            vmem_limit_bytes=32 * 1024 * 1024,
        ),
    )(x_bf16, wq, wk, wv, bq, bk, bv, wproj_h, bproj2)
    return y, att


def _reference(x, w_attn, b_attn, w_proj, b_proj, n_head):
    """Pure-JAX f32 reference mirroring the PyTorch forward."""
    B, T, C = x.shape
    hd = C // n_head
    qkv = x @ w_attn + b_attn
    q, k, v = jnp.split(qkv, 3, axis=-1)
    q = q.reshape(B, T, n_head, hd).transpose(0, 2, 1, 3)
    k = k.reshape(B, T, n_head, hd).transpose(0, 2, 1, 3)
    v = v.reshape(B, T, n_head, hd).transpose(0, 2, 1, 3)
    att = jnp.einsum("bhqd,bhkd->bhqk", q, k) * (1.0 / math.sqrt(hd))
    mask = jnp.tril(jnp.ones((T, T), bool))
    att = jnp.where(mask[None, None], att, -jnp.inf)
    att = jax.nn.softmax(att, axis=-1)
    y = jnp.einsum("bhqk,bhkd->bhqd", att, v)
    y = y.transpose(0, 2, 1, 3).reshape(B, T, C)
    y = y @ w_proj + b_proj
    return y, att


if __name__ == "__main__":
    # Config: n_embd=32, n_head=4, block_size=8, bias=True; inputs B=2, T=8.
    B, T, C, n_head = 2, 8, 32, 4

    key = jax.random.PRNGKey(0)
    kx, kw1, kb1, kw2, kb2 = jax.random.split(key, 5)

    x = jax.random.normal(kx, (B, T, C), jnp.float32)
    w_attn = jax.random.normal(kw1, (C, 3 * C), jnp.float32) * 0.02
    b_attn = jax.random.normal(kb1, (3 * C,), jnp.float32) * 0.02
    w_proj = jax.random.normal(kw2, (C, C), jnp.float32) * 0.02
    b_proj = jax.random.normal(kb2, (C,), jnp.float32) * 0.02

    y, att = causal_self_attention(x, w_attn, b_attn, w_proj, b_proj, n_head)
    jax.block_until_ready((y, att))

    y_ref, att_ref = _reference(x, w_attn, b_attn, w_proj, b_proj, n_head)
    # bf16 MXU inputs + approx reciprocal => loosen tolerances vs. the f32 reference.
    assert jnp.allclose(y, y_ref, atol=2e-2, rtol=2e-2)
    assert jnp.allclose(att, att_ref, atol=2e-2, rtol=2e-2)

    print("KERNEL_OK")
</pallas_src>

<mosaic_0001>
module attributes {stable_mosaic.version = 11 : i64} {
  func.func @_causal_attn_kernel(%arg0: i32, %arg1: i32, %arg2: memref<1x8x32xbf16, #tpu.memory_space<vmem>>, %arg3: memref<1x32x8xbf16, #tpu.memory_space<vmem>>, %arg4: memref<1x32x8xbf16, #tpu.memory_space<vmem>>, %arg5: memref<1x32x8xbf16, #tpu.memory_space<vmem>>, %arg6: memref<1x1x8xf32, #tpu.memory_space<vmem>>, %arg7: memref<1x1x8xf32, #tpu.memory_space<vmem>>, %arg8: memref<1x1x8xf32, #tpu.memory_space<vmem>>, %arg9: memref<1x8x32xbf16, #tpu.memory_space<vmem>>, %arg10: memref<1x32xf32, #tpu.memory_space<vmem>>, %arg11: memref<1x8x32xf32, #tpu.memory_space<vmem>>, %arg12: memref<1x1x8x8xf32, #tpu.memory_space<vmem>>, %arg13: memref<8x32xf32, #tpu.memory_space<vmem>>) attributes {dimension_semantics = [#tpu.dimension_semantics<parallel>, #tpu.dimension_semantics<arbitrary>], iteration_bounds = array<i64: 2, 4>, scalar_prefetch = 0 : i64, scratch_operands = 1 : i64, tpu.core_type = #tpu.core_type<tc>, window_params = [{transform_indices = @transform_0, window_bounds = array<i64: 1, 8, 32>}, {transform_indices = @transform_1, window_bounds = array<i64: 1, 32, 8>}, {transform_indices = @transform_2, window_bounds = array<i64: 1, 32, 8>}, {transform_indices = @transform_3, window_bounds = array<i64: 1, 32, 8>}, {transform_indices = @transform_4, window_bounds = array<i64: 1, 1, 8>}, {transform_indices = @transform_5, window_bounds = array<i64: 1, 1, 8>}, {transform_indices = @transform_6, window_bounds = array<i64: 1, 1, 8>}, {transform_indices = @transform_7, window_bounds = array<i64: 1, 8, 32>}, {pipeline_mode = #tpu.pipeline_mode<synchronous>, transform_indices = @transform_8, window_bounds = array<i64: 1, 32>}, {transform_indices = @transform_9, window_bounds = array<i64: 1, 8, 32>}, {transform_indices = @transform_10, window_bounds = array<i64: 1, 1, 8, 8>}]} {
    %c0 = arith.constant 0 : index
    %c0_0 = arith.constant 0 : index
    %c0_1 = arith.constant 0 : index
    %0 = vector.load %arg2[%c0, %c0_0, %c0_1] : memref<1x8x32xbf16, #tpu.memory_space<vmem>>, vector<1x8x32xbf16>
    %1 = vector.shape_cast %0 : vector<1x8x32xbf16> to vector<8x32xbf16>
    %c0_i32 = arith.constant 0 : i32
    %2 = arith.cmpi eq, %arg1, %c0_i32 : i32
    %3 = arith.extui %2 : i1 to i32
    %c0_i32_2 = arith.constant 0 : i32
    %4 = arith.cmpi ne, %3, %c0_i32_2 : i32
    scf.if %4 {
      %c0_42 = arith.constant 0 : index
      %c0_43 = arith.constant 0 : index
      %62 = vector.load %arg10[%c0_42, %c0_43] : memref<1x32xf32, #tpu.memory_space<vmem>>, vector<1x32xf32>
      %63 = vector.shape_cast %62 : vector<1x32xf32> to vector<1x32xf32>
      %64 = vector.broadcast %63 : vector<1x32xf32> to vector<8x32xf32>
      %c0_44 = arith.constant 0 : index
      %c0_45 = arith.constant 0 : index
      %65 = vector.load %arg13[%c0_44, %c0_45] : memref<8x32xf32, #tpu.memory_space<vmem>>, vector<8x32xf32>
      tpu.vector_store %arg13[%c0_44, %c0_45], %64 {strides = array<i32>} : memref<8x32xf32, #tpu.memory_space<vmem>>, vector<8x32xf32>,
    } else {
    }
    %c0_3 = arith.constant 0 : index
    %c0_4 = arith.constant 0 : index
    %c0_5 = arith.constant 0 : index
    %5 = vector.load %arg3[%c0_3, %c0_4, %c0_5] : memref<1x32x8xbf16, #tpu.memory_space<vmem>>, vector<1x32x8xbf16>
    %6 = vector.shape_cast %5 : vector<1x32x8xbf16> to vector<32x8xbf16>
    %cst = arith.constant dense<0.000000e+00> : vector<8x8xf32>
    %7 = tpu.matmul %1, %6, %cst {dimension_numbers = #tpu.dot_dimension_numbers<[1], [0], [0], [1], [0, 0, 1, 1], [], []>} : vector<8x32xbf16>, vector<32x8xbf16>, vector<8x8xf32> -> vector<8x8xf32>
    %c0_6 = arith.constant 0 : index
    %c0_7 = arith.constant 0 : index
    %c0_8 = arith.constant 0 : index
    %8 = vector.load %arg6[%c0_6, %c0_7, %c0_8] : memref<1x1x8xf32, #tpu.memory_space<vmem>>, vector<1x1x8xf32>
    %9 = vector.shape_cast %8 : vector<1x1x8xf32> to vector<1x8xf32>
    %10 = vector.broadcast %9 : vector<1x8xf32> to vector<8x8xf32>
    %11 = arith.addf %7, %10 : vector<8x8xf32>
    %c0_9 = arith.constant 0 : index
    %c0_10 = arith.constant 0 : index
    %c0_11 = arith.constant 0 : index
    %12 = vector.load %arg4[%c0_9, %c0_10, %c0_11] : memref<1x32x8xbf16, #tpu.memory_space<vmem>>, vector<1x32x8xbf16>
    %13 = vector.shape_cast %12 : vector<1x32x8xbf16> to vector<32x8xbf16>
    %cst_12 = arith.constant dense<0.000000e+00> : vector<8x8xf32>
    %14 = tpu.matmul %1, %13, %cst_12 {dimension_numbers = #tpu.dot_dimension_numbers<[1], [0], [0], [1], [0, 0, 1, 1], [], []>} : vector<8x32xbf16>, vector<32x8xbf16>, vector<8x8xf32> -> vector<8x8xf32>
    %c0_13 = arith.constant 0 : index
    %c0_14 = arith.constant 0 : index
    %c0_15 = arith.constant 0 : index
    %15 = vector.load %arg7[%c0_13, %c0_14, %c0_15] : memref<1x1x8xf32, #tpu.memory_space<vmem>>, vector<1x1x8xf32>
    %16 = vector.shape_cast %15 : vector<1x1x8xf32> to vector<1x8xf32>
    %17 = vector.broadcast %16 : vector<1x8xf32> to vector<8x8xf32>
    %18 = arith.addf %14, %17 : vector<8x8xf32>
    %c0_16 = arith.constant 0 : index
    %c0_17 = arith.constant 0 : index
    %c0_18 = arith.constant 0 : index
    %19 = vector.load %arg5[%c0_16, %c0_17, %c0_18] : memref<1x32x8xbf16, #tpu.memory_space<vmem>>, vector<1x32x8xbf16>
    %20 = vector.shape_cast %19 : vector<1x32x8xbf16> to vector<32x8xbf16>
    %cst_19 = arith.constant dense<0.000000e+00> : vector<8x8xf32>
    %21 = tpu.matmul %1, %20, %cst_19 {dimension_numbers = #tpu.dot_dimension_numbers<[1], [0], [0], [1], [0, 0, 1, 1], [], []>} : vector<8x32xbf16>, vector<32x8xbf16>, vector<8x8xf32> -> vector<8x8xf32>
    %c0_20 = arith.constant 0 : index
    %c0_21 = arith.constant 0 : index
    %c0_22 = arith.constant 0 : index
    %22 = vector.load %arg8[%c0_20, %c0_21, %c0_22] : memref<1x1x8xf32, #tpu.memory_space<vmem>>, vector<1x1x8xf32>
    %23 = vector.shape_cast %22 : vector<1x1x8xf32> to vector<1x8xf32>
    %24 = vector.broadcast %23 : vector<1x8xf32> to vector<8x8xf32>
    %25 = arith.addf %21, %24 : vector<8x8xf32>
    %26 = arith.truncf %11 : vector<8x8xf32> to vector<8x8xbf16>
    %27 = arith.truncf %18 : vector<8x8xf32> to vector<8x8xbf16>
    %cst_23 = arith.constant dense<0.000000e+00> : vector<8x8xf32>
    %28 = tpu.matmul %26, %27, %cst_23 {dimension_numbers = #tpu.dot_dimension_numbers<[1], [1], [0], [0], [0, 0, 1, 0], [], []>} : vector<8x8xbf16>, vector<8x8xbf16>, vector<8x8xf32> -> vector<8x8xf32>
    %cst_24 = arith.constant 0.353553385 : f32
    %29 = vector.broadcast %cst_24 : f32 to vector<8x8xf32>
    %30 = arith.mulf %28, %29 : vector<8x8xf32>
    %31 = tpu.iota {dimensions = array<i32: 0>} : vector<8x8xi32>
    %32 = tpu.iota {dimensions = array<i32: 1>} : vector<8x8xi32>
    %33 = arith.cmpi sge, %31, %32 : vector<8x8xi32>
    %cst_25 = arith.constant -1.000000e+30 : f32
    %34 = vector.broadcast %cst_25 : f32 to vector<8x8xf32>
    %35 = arith.select %33, %30, %34 : vector<8x8xi1>, vector<8x8xf32>
    %cst_26 = arith.constant dense<0xFF800000> : vector<8xf32>
    %36 = vector.multi_reduction <maximumf>, %35, %cst_26 [1] : vector<8x8xf32> to vector<8xf32>
    %37 = vector.shape_cast %36 : vector<8xf32> to vector<8x1xf32>
    %38 = vector.broadcast %37 : vector<8x1xf32> to vector<8x8xf32>
    %39 = arith.subf %35, %38 : vector<8x8xf32>
    %40 = math.exp %39 : vector<8x8xf32>
    %cst_27 = arith.constant dense<0.000000e+00> : vector<8xf32>
    %41 = vector.multi_reduction <add>, %40, %cst_27 [1] : vector<8x8xf32> to vector<8xf32>
    %42 = vector.shape_cast %41 : vector<8xf32> to vector<8x1xf32>
    %43 = tpu.reciprocal %42 {approx = true} : vector<8x1xf32> -> vector<8x1xf32>
    %44 = vector.broadcast %43 : vector<8x1xf32> to vector<8x8xf32>
    %45 = arith.mulf %40, %44 : vector<8x8xf32>
    %c0_28 = arith.constant 0 : index
    %c0_29 = arith.constant 0 : index
    %c0_30 = arith.constant 0 : index
    %c0_31 = arith.constant 0 : index
    %46 = vector.load %arg12[%c0_28, %c0_29, %c0_30, %c0_31] : memref<1x1x8x8xf32, #tpu.memory_space<vmem>>, vector<1x1x8x8xf32>
    %47 = vector.shape_cast %46 : vector<1x1x8x8xf32> to vector<8x8xf32>
    %48 = vector.shape_cast %45 : vector<8x8xf32> to vector<1x1x8x8xf32>
    tpu.vector_store %arg12[%c0_28, %c0_29, %c0_30, %c0_31], %48 {strides = array<i32>} : memref<1x1x8x8xf32, #tpu.memory_space<vmem>>, vector<1x1x8x8xf32>,
    %49 = arith.truncf %45 : vector<8x8xf32> to vector<8x8xbf16>
    %50 = arith.truncf %25 : vector<8x8xf32> to vector<8x8xbf16>
    %cst_32 = arith.constant dense<0.000000e+00> : vector<8x8xf32>
    %51 = tpu.matmul %49, %50, %cst_32 {dimension_numbers = #tpu.dot_dimension_numbers<[1], [0], [0], [1], [0, 0, 1, 1], [], []>} : vector<8x8xbf16>, vector<8x8xbf16>, vector<8x8xf32> -> vector<8x8xf32>
    %c0_33 = arith.constant 0 : index
    %c0_34 = arith.constant 0 : index
    %52 = vector.load %arg13[%c0_33, %c0_34] : memref<8x32xf32, #tpu.memory_space<vmem>>, vector<8x32xf32>
    %53 = arith.truncf %51 : vector<8x8xf32> to vector<8x8xbf16>
    %c0_35 = arith.constant 0 : index
    %c0_36 = arith.constant 0 : index
    %c0_37 = arith.constant 0 : index
    %54 = vector.load %arg9[%c0_35, %c0_36, %c0_37] : memref<1x8x32xbf16, #tpu.memory_space<vmem>>, vector<1x8x32xbf16>
    %55 = vector.shape_cast %54 : vector<1x8x32xbf16> to vector<8x32xbf16>
    %cst_38 = arith.constant dense<0.000000e+00> : vector<8x32xf32>
    %56 = tpu.matmul %53, %55, %cst_38 {dimension_numbers = #tpu.dot_dimension_numbers<[1], [0], [0], [1], [0, 0, 1, 1], [], []>} : vector<8x8xbf16>, vector<8x32xbf16>, vector<8x32xf32> -> vector<8x32xf32>
    %57 = arith.addf %52, %56 : vector<8x32xf32>
    %c0_39 = arith.constant 0 : index
    %c0_40 = arith.constant 0 : index
    %58 = vector.load %arg13[%c0_39, %c0_40] : memref<8x32xf32, #tpu.memory_space<vmem>>, vector<8x32xf32>
    tpu.vector_store %arg13[%c0_39, %c0_40], %57 {strides = array<i32>} : memref<8x32xf32, #tpu.memory_space<vmem>>, vector<8x32xf32>,
    %c3_i32 = arith.constant 3 : i32
    %59 = arith.cmpi eq, %arg1, %c3_i32 : i32
    %60 = arith.extui %59 : i1 to i32
    %c0_i32_41 = arith.constant 0 : i32
    %61 = arith.cmpi ne, %60, %c0_i32_41 : i32
    scf.if %61 {
      %c0_42 = arith.constant 0 : index
      %c0_43 = arith.constant 0 : index
      %62 = vector.load %arg13[%c0_42, %c0_43] : memref<8x32xf32, #tpu.memory_space<vmem>>, vector<8x32xf32>
      %c0_44 = arith.constant 0 : index
      %c0_45 = arith.constant 0 : index
      %c0_46 = arith.constant 0 : index
      %63 = vector.load %arg11[%c0_44, %c0_45, %c0_46] : memref<1x8x32xf32, #tpu.memory_space<vmem>>, vector<1x8x32xf32>
      %64 = vector.shape_cast %63 : vector<1x8x32xf32> to vector<8x32xf32>
      %65 = vector.shape_cast %62 : vector<8x32xf32> to vector<1x8x32xf32>
      tpu.vector_store %arg11[%c0_44, %c0_45, %c0_46], %65 {strides = array<i32>} : memref<1x8x32xf32, #tpu.memory_space<vmem>>, vector<1x8x32xf32>,
    } else {
    }
    return
  }
  func.func @transform_0(%arg0: i32, %arg1: i32) -> (i32, i32, i32) {
    %c0_i32 = arith.constant 0 : i32
    %c0_i32_0 = arith.constant 0 : i32
    %c0_i32_1 = arith.constant 0 : i32
    return %arg0, %c0_i32, %c0_i32_0 : i32, i32, i32
  }
  func.func @transform_1(%arg0: i32, %arg1: i32) -> (i32, i32, i32) {
    %c0_i32 = arith.constant 0 : i32
    %c0_i32_0 = arith.constant 0 : i32
    %c0_i32_1 = arith.constant 0 : i32
    return %arg1, %c0_i32, %c0_i32_0 : i32, i32, i32
  }
  func.func @transform_2(%arg0: i32, %arg1: i32) -> (i32, i32, i32) {
    %c0_i32 = arith.constant 0 : i32
    %c0_i32_0 = arith.constant 0 : i32
    %c0_i32_1 = arith.constant 0 : i32
    return %arg1, %c0_i32, %c0_i32_0 : i32, i32, i32
  }
  func.func @transform_3(%arg0: i32, %arg1: i32) -> (i32, i32, i32) {
    %c0_i32 = arith.constant 0 : i32
    %c0_i32_0 = arith.constant 0 : i32
    %c0_i32_1 = arith.constant 0 : i32
    return %arg1, %c0_i32, %c0_i32_0 : i32, i32, i32
  }
  func.func @transform_4(%arg0: i32, %arg1: i32) -> (i32, i32, i32) {
    %c0_i32 = arith.constant 0 : i32
    %c0_i32_0 = arith.constant 0 : i32
    %c0_i32_1 = arith.constant 0 : i32
    return %arg1, %c0_i32, %c0_i32_0 : i32, i32, i32
  }
  func.func @transform_5(%arg0: i32, %arg1: i32) -> (i32, i32, i32) {
    %c0_i32 = arith.constant 0 : i32
    %c0_i32_0 = arith.constant 0 : i32
    %c0_i32_1 = arith.constant 0 : i32
    return %arg1, %c0_i32, %c0_i32_0 : i32, i32, i32
  }
  func.func @transform_6(%arg0: i32, %arg1: i32) -> (i32, i32, i32) {
    %c0_i32 = arith.constant 0 : i32
    %c0_i32_0 = arith.constant 0 : i32
    %c0_i32_1 = arith.constant 0 : i32
    return %arg1, %c0_i32, %c0_i32_0 : i32, i32, i32
  }
  func.func @transform_7(%arg0: i32, %arg1: i32) -> (i32, i32, i32) {
    %c0_i32 = arith.constant 0 : i32
    %c0_i32_0 = arith.constant 0 : i32
    %c0_i32_1 = arith.constant 0 : i32
    return %arg1, %c0_i32, %c0_i32_0 : i32, i32, i32
  }
  func.func @transform_8(%arg0: i32, %arg1: i32) -> (i32, i32) {
    %c0_i32 = arith.constant 0 : i32
    %c0_i32_0 = arith.constant 0 : i32
    %c0_i32_1 = arith.constant 0 : i32
    return %c0_i32, %c0_i32_0 : i32, i32
  }
  func.func @transform_9(%arg0: i32, %arg1: i32) -> (i32, i32, i32) {
    %c0_i32 = arith.constant 0 : i32
    %c0_i32_0 = arith.constant 0 : i32
    %c0_i32_1 = arith.constant 0 : i32
    return %arg0, %c0_i32, %c0_i32_0 : i32, i32, i32
  }
  func.func @transform_10(%arg0: i32, %arg1: i32) -> (i32, i32, i32, i32) {
    %c0_i32 = arith.constant 0 : i32
    %c0_i32_0 = arith.constant 0 : i32
    %c0_i32_1 = arith.constant 0 : i32
    return %arg0, %arg1, %c0_i32, %c0_i32_0 : i32, i32, i32, i32
  }
}

</mosaic_0001>

<llo_original>
// kernel: tpu_custom_call.1
$region0: #{tpu_custom_call.1}
  #allocation0 [shape = 'u32[]', space=smem, size = 0x4, offset = 0x4, fixed_abs, tag = 'smem constant byte address 0x4 - core index']
  #allocation1 [shape = 'u32[144,128]{1,0:T(1,128)}', space=vmem, size = 0x12000, scoped, tag = 'internal scratch']
  #allocation2 [shape = 'f32[8,32]{1,0:T(8,128)}', space=vmem, size = 0x1000, scoped, tag = 'scratch operand']
  %s0 = inlined_call_operand.vmem [shape: bf16[2,8,32], index: 0, kind: input, shape index: {}]
  %s1 = inlined_call_operand.vmem [shape: bf16[4,32,8], index: 1, kind: input, shape index: {}]
  %s2 = inlined_call_operand.vmem [shape: bf16[4,32,8], index: 2, kind: input, shape index: {}]
  %s3 = inlined_call_operand.vmem [shape: bf16[4,32,8], index: 3, kind: input, shape index: {}]
  %s4 = inlined_call_operand.vmem [shape: f32[4,1,8], index: 4, kind: input, shape index: {}]
  %s5 = inlined_call_operand.vmem [shape: f32[4,1,8], index: 5, kind: input, shape index: {}]
  %s6 = inlined_call_operand.vmem [shape: f32[4,1,8], index: 6, kind: input, shape index: {}]
  %s7 = inlined_call_operand.vmem [shape: bf16[4,8,32], index: 7, kind: input, shape index: {}]
  %s8 = inlined_call_operand.vmem [shape: f32[1,32], index: 8, kind: input, shape index: {}]
  %s9 = inlined_call_operand.hbm [shape: f32[2,8,32], index: 9, kind: output, shape index: {0}]
  %s10 = inlined_call_operand.hbm [shape: f32[2,4,8,8], index: 10, kind: output, shape index: {1}]
  %11 = xla_tuple %s9, %s10
  %s12 = sld [smem:[#allocation0]]
  $region85: #{tpu_custom_call.1} parent=0
    _
  %s14 = ssub.s32 1, %s12
  %s15 = scalar_select 0, %s14, %s12
  $region1: #{tpu_custom_call.1} parent=0
    #allocation3 [shape = 'u8[8192]{0}', space=vmem, size = 0x2000, scoped, tag = 'output window, operand 0']
    #allocation4 [shape = 's32[2]{0}', space=sflag, size = 0x8, scoped, tag = 'scoped memory for tpu_custom_call.1']
    #allocation5 [shape = 'u8[8192]{0}', space=vmem, size = 0x2000, scoped, tag = 'output window, operand 1']
    #allocation6 [shape = 's32[2]{0}', space=sflag, size = 0x8, scoped, tag = 'scoped memory for tpu_custom_call.1']
    %16 = vsyncpa [#allocation4], 0
    %s17 = scalar_lea.sflag [#allocation4], 1
    %18 = vsyncpa %s17, 0
    %19 = vsyncpa [#allocation6], 0
    %s20 = scalar_lea.sflag [#allocation6], 1
    %21 = vsyncpa %s20, 0
    loop: start=0, step=1, limit=10
    $region2: #{tpu_custom_call.1} parent=1 // loop_pre_header
      _
    $region3: #{tpu_custom_call.1} parent=1 // loop_header
      %s23 = sphi 0, %s27
      %p24 = scmp.ge.s32.totalorder %s23, 10
      %s30 = sphi 0, %s42
      %s31 = sphi 0, %s38
      %s32 = sphi 0, %s30
      %s33 = sphi 0, %s31
      %s34 = sphi 0, %s32
      %s35 = sphi 0, %s33
      %s45 = sphi 0, %s47
      %s48 = sphi 0, %s45
      %s49 = sphi 0, %s48
      %s65 = sphi 0, %s49
      %s71 = sphi 0, %s73
      %s74 = sphi 0, %s71
      %s75 = sphi 0, %s74
      %s91 = sphi 0, %s75
      %s97 = sphi 0, %s99
      %s100 = sphi 0, %s97
      %s101 = sphi 0, %s100
      %s117 = sphi 0, %s101
      %s123 = sphi 0, %s125
      %s126 = sphi 0, %s123
      %s127 = sphi 0, %s126
      %s143 = sphi 0, %s127
      %s149 = sphi 0, %s151
      %s152 = sphi 0, %s149
      %s153 = sphi 0, %s152
      %s169 = sphi 0, %s153
      %s175 = sphi 0, %s177
      %s178 = sphi 0, %s175
      %s179 = sphi 0, %s178
      %s195 = sphi 0, %s179
      %s201 = sphi 0, %s203
      %s204 = sphi 0, %s201
      %s205 = sphi 0, %s204
      %s221 = sphi 0, %s205
      %s227 = sphi 0, %s229
      %s230 = sphi 0, %s227
      %s231 = sphi 0, %s230
      %s247 = sphi 0, %s231
      %s251 = sphi 0, %s251
      %s253 = sphi 0, %s251
      %s254 = sphi 0, %s253
      %s268 = sphi 0, %s254
      %s274 = sphi 0, %s276
      %s277 = sphi 0, %s274
      %s278 = sphi 0, %s277
      %s294 = sphi 0, %s278
      %s302 = sphi 0, %s304
      %s305 = sphi 0, %s302
      %s306 = sphi 0, %s305
      %s322 = sphi 0, %s306
    $region4: #{tpu_custom_call.1} parent=1 // loop_header_branch
      %26 = sbr.rel (%p24) target = $region8
    $region5: #{tpu_custom_call.1} parent=1 // loop_body
      %s28 = ssub.s32 %s23, 1
      %s29 = ssub.s32 %s23, 2
      %s36 = sadd.s32 1, %s31
      %p37 = scmp.ge.s32.totalorder %s36, 4
      %s38 = scalar_select %p37, 0, %s36
      %s39 = sadd.s32 1, %s30
      %s40 = scalar_select %p37, %s39, %s30
      %p41 = scmp.ge.s32.totalorder %s40, 2
      %s42 = scalar_select %p41, 0, %s40
      %s43 = ssub.s32 %s30, %s42
      %p44 = scmp.eq.s32.totalorder %s43, 0
      %s46 = sadd.s32 %s45, 1
      %s47 = scalar_select %p44, %s45, %s46
      %p50 = pneg %p44
      %p51 = scmp.eq.s32.totalorder %s23, 7
      %p52 = por %p50, %p51
      %p53 = scmp.ne.s32.totalorder %s45, %s48
      %p54 = scmp.eq.s32.totalorder %s23, 0
      %p55 = por %p53, %p54
      %p56 = scmp.ne.s32.totalorder %s45, %s48
      %p57 = scmp.eq.s32.totalorder %s28, 7
      %p58 = por %p56, %p57
      %p59 = scmp.ne.s32.totalorder %s48, %s49
      %p60 = scmp.eq.s32.totalorder %s28, 0
      %p61 = por %p59, %p60
      %p62 = scmp.ne.s32.totalorder %s48, %s49
      %p63 = scmp.eq.s32.totalorder %s29, 7
      %p64 = por %p62, %p63
      %p66 = scmp.ne.s32.totalorder %s49, %s65
      %p67 = scmp.eq.s32.totalorder %s29, 0
      %p68 = por %p66, %p67
      %s69 = ssub.s32 %s31, %s38
      %p70 = scmp.eq.s32.totalorder %s69, 0
      %s72 = sadd.s32 %s71, 1
      %s73 = scalar_select %p70, %s71, %s72
      %p76 = pneg %p70
      %p77 = scmp.eq.s32.totalorder %s23, 7
      %p78 = por %p76, %p77
      %p79 = scmp.ne.s32.totalorder %s71, %s74
      %p80 = scmp.eq.s32.totalorder %s23, 0
      %p81 = por %p79, %p80
      %p82 = scmp.ne.s32.totalorder %s71, %s74
      %p83 = scmp.eq.s32.totalorder %s28, 7
      %p84 = por %p82, %p83
      %p85 = scmp.ne.s32.totalorder %s74, %s75
      %p86 = scmp.eq.s32.totalorder %s28, 0
      %p87 = por %p85, %p86
      %p88 = scmp.ne.s32.totalorder %s74, %s75
      %p89 = scmp.eq.s32.totalorder %s29, 7
      %p90 = por %p88, %p89
      %p92 = scmp.ne.s32.totalorder %s75, %s91
      %p93 = scmp.eq.s32.totalorder %s29, 0
      %p94 = por %p92, %p93
      %s95 = ssub.s32 %s31, %s38
      %p96 = scmp.eq.s32.totalorder %s95, 0
      %s98 = sadd.s32 %s97, 1
      %s99 = scalar_select %p96, %s97, %s98
      %p102 = pneg %p96
      %p103 = scmp.eq.s32.totalorder %s23, 7
      %p104 = por %p102, %p103
      %p105 = scmp.ne.s32.totalorder %s97, %s100
      %p106 = scmp.eq.s32.totalorder %s23, 0
      %p107 = por %p105, %p106
      %p108 = scmp.ne.s32.totalorder %s97, %s100
      %p109 = scmp.eq.s32.totalorder %s28, 7
      %p110 = por %p108, %p109
      %p111 = scmp.ne.s32.totalorder %s100, %s101
      %p112 = scmp.eq.s32.totalorder %s28, 0
      %p113 = por %p111, %p112
      %p114 = scmp.ne.s32.totalorder %s100, %s101
      %p115 = scmp.eq.s32.totalorder %s29, 7
      %p116 = por %p114, %p115
      %p118 = scmp.ne.s32.totalorder %s101, %s117
      %p119 = scmp.eq.s32.totalorder %s29, 0
      %p120 = por %p118, %p119
      %s121 = ssub.s32 %s31, %s38
      %p122 = scmp.eq.s32.totalorder %s121, 0
      %s124 = sadd.s32 %s123, 1
      %s125 = scalar_select %p122, %s123, %s124
      %p128 = pneg %p122
      %p129 = scmp.eq.s32.totalorder %s23, 7
      %p130 = por %p128, %p129
      %p131 = scmp.ne.s32.totalorder %s123, %s126
      %p132 = scmp.eq.s32.totalorder %s23, 0
      %p133 = por %p131, %p132
      %p134 = scmp.ne.s32.totalorder %s123, %s126
      %p135 = scmp.eq.s32.totalorder %s28, 7
      %p136 = por %p134, %p135
      %p137 = scmp.ne.s32.totalorder %s126, %s127
      %p138 = scmp.eq.s32.totalorder %s28, 0
      %p139 = por %p137, %p138
      %p140 = scmp.ne.s32.totalorder %s126, %s127
      %p141 = scmp.eq.s32.totalorder %s29, 7
      %p142 = por %p140, %p141
      %p144 = scmp.ne.s32.totalorder %s127, %s143
      %p145 = scmp.eq.s32.totalorder %s29, 0
      %p146 = por %p144, %p145
      %s147 = ssub.s32 %s31, %s38
      %p148 = scmp.eq.s32.totalorder %s147, 0
      %s150 = sadd.s32 %s149, 1
      %s151 = scalar_select %p148, %s149, %s150
      %p154 = pneg %p148
      %p155 = scmp.eq.s32.totalorder %s23, 7
      %p156 = por %p154, %p155
      %p157 = scmp.ne.s32.totalorder %s149, %s152
      %p158 = scmp.eq.s32.totalorder %s23, 0
      %p159 = por %p157, %p158
      %p160 = scmp.ne.s32.totalorder %s149, %s152
      %p161 = scmp.eq.s32.totalorder %s28, 7
      %p162 = por %p160, %p161
      %p163 = scmp.ne.s32.totalorder %s152, %s153
      %p164 = scmp.eq.s32.totalorder %s28, 0
      %p165 = por %p163, %p164
      %p166 = scmp.ne.s32.totalorder %s152, %s153
      %p167 = scmp.eq.s32.totalorder %s29, 7
      %p168 = por %p166, %p167
      %p170 = scmp.ne.s32.totalorder %s153, %s169
      %p171 = scmp.eq.s32.totalorder %s29, 0
      %p172 = por %p170, %p171
      %s173 = ssub.s32 %s31, %s38
      %p174 = scmp.eq.s32.totalorder %s173, 0
      %s176 = sadd.s32 %s175, 1
      %s177 = scalar_select %p174, %s175, %s176
      %p180 = pneg %p174
      %p181 = scmp.eq.s32.totalorder %s23, 7
      %p182 = por %p180, %p181
      %p183 = scmp.ne.s32.totalorder %s175, %s178
      %p184 = scmp.eq.s32.totalorder %s23, 0
      %p185 = por %p183, %p184
      %p186 = scmp.ne.s32.totalorder %s175, %s178
      %p187 = scmp.eq.s32.totalorder %s28, 7
      %p188 = por %p186, %p187
      %p189 = scmp.ne.s32.totalorder %s178, %s179
      %p190 = scmp.eq.s32.totalorder %s28, 0
      %p191 = por %p189, %p190
      %p192 = scmp.ne.s32.totalorder %s178, %s179
      %p193 = scmp.eq.s32.totalorder %s29, 7
      %p194 = por %p192, %p193
      %p196 = scmp.ne.s32.totalorder %s179, %s195
      %p197 = scmp.eq.s32.totalorder %s29, 0
      %p198 = por %p196, %p197
      %s199 = ssub.s32 %s31, %s38
      %p200 = scmp.eq.s32.totalorder %s199, 0
      %s202 = sadd.s32 %s201, 1
      %s203 = scalar_select %p200, %s201, %s202
      %p206 = pneg %p200
      %p207 = scmp.eq.s32.totalorder %s23, 7
      %p208 = por %p206, %p207
      %p209 = scmp.ne.s32.totalorder %s201, %s204
      %p210 = scmp.eq.s32.totalorder %s23, 0
      %p211 = por %p209, %p210
      %p212 = scmp.ne.s32.totalorder %s201, %s204
      %p213 = scmp.eq.s32.totalorder %s28, 7
      %p214 = por %p212, %p213
      %p215 = scmp.ne.s32.totalorder %s204, %s205
      %p216 = scmp.eq.s32.totalorder %s28, 0
      %p217 = por %p215, %p216
      %p218 = scmp.ne.s32.totalorder %s204, %s205
      %p219 = scmp.eq.s32.totalorder %s29, 7
      %p220 = por %p218, %p219
      %p222 = scmp.ne.s32.totalorder %s205, %s221
      %p223 = scmp.eq.s32.totalorder %s29, 0
      %p224 = por %p222, %p223
      %s225 = ssub.s32 %s31, %s38
      %p226 = scmp.eq.s32.totalorder %s225, 0
      %s228 = sadd.s32 %s227, 1
      %s229 = scalar_select %p226, %s227, %s228
      %p232 = pneg %p226
      %p233 = scmp.eq.s32.totalorder %s23, 7
      %p234 = por %p232, %p233
      %p235 = scmp.ne.s32.totalorder %s227, %s230
      %p236 = scmp.eq.s32.totalorder %s23, 0
      %p237 = por %p235, %p236
      %p238 = scmp.ne.s32.totalorder %s227, %s230
      %p239 = scmp.eq.s32.totalorder %s28, 7
      %p240 = por %p238, %p239
      %p241 = scmp.ne.s32.totalorder %s230, %s231
      %p242 = scmp.eq.s32.totalorder %s28, 0
      %p243 = por %p241, %p242
      %p244 = scmp.ne.s32.totalorder %s230, %s231
      %p245 = scmp.eq.s32.totalorder %s29, 7
      %p246 = por %p244, %p245
      %p248 = scmp.ne.s32.totalorder %s231, %s247
      %p249 = scmp.eq.s32.totalorder %s29, 0
      %p250 = por %p248, %p249
      %s252 = sadd.s32 %s251, 1
      %p255 = scmp.eq.s32.totalorder %s23, 7
      %p256 = scmp.ne.s32.totalorder %s251, %s253
      %p257 = scmp.eq.s32.totalorder %s23, 0
      %p258 = por %p256, %p257
      %p259 = scmp.ne.s32.totalorder %s251, %s253
      %p260 = scmp.eq.s32.totalorder %s28, 7
      %p261 = por %p259, %p260
      %p262 = scmp.ne.s32.totalorder %s253, %s254
      %p263 = scmp.eq.s32.totalorder %s28, 0
      %p264 = por %p262, %p263
      %p265 = scmp.ne.s32.totalorder %s253, %s254
      %p266 = scmp.eq.s32.totalorder %s29, 7
      %p267 = por %p265, %p266
      %p269 = scmp.ne.s32.totalorder %s254, %s268
      %p270 = scmp.eq.s32.totalorder %s29, 0
      %p271 = por %p269, %p270
      %s272 = ssub.s32 %s30, %s42
      %p273 = scmp.eq.s32.totalorder %s272, 0
      %s275 = sadd.s32 %s274, 1
      %s276 = scalar_select %p273, %s274, %s275
      %p279 = pneg %p273
      %p280 = scmp.eq.s32.totalorder %s23, 7
      %p281 = por %p279, %p280
      %p282 = scmp.ne.s32.totalorder %s274, %s277
      %p283 = scmp.eq.s32.totalorder %s23, 0
      %p284 = por %p282, %p283
      %p285 = scmp.ne.s32.totalorder %s274, %s277
      %p286 = scmp.eq.s32.totalorder %s28, 7
      %p287 = por %p285, %p286
      %p288 = scmp.ne.s32.totalorder %s277, %s278
      %p289 = scmp.eq.s32.totalorder %s28, 0
      %p290 = por %p288, %p289
      %p291 = scmp.ne.s32.totalorder %s277, %s278
      %p292 = scmp.eq.s32.totalorder %s29, 7
      %p293 = por %p291, %p292
      %p295 = scmp.ne.s32.totalorder %s278, %s294
      %p296 = scmp.eq.s32.totalorder %s29, 0
      %p297 = por %p295, %p296
      %s298 = ssub.s32 %s30, %s42
      %s299 = ssub.s32 %s31, %s38
      %s300 = sor.u32 %s298, %s299
      %p301 = scmp.eq.s32.totalorder %s300, 0
      %s303 = sadd.s32 %s302, 1
      %s304 = scalar_select %p301, %s302, %s303
      %p307 = pneg %p301
      %p308 = scmp.eq.s32.totalorder %s23, 7
      %p309 = por %p307, %p308
      %p310 = scmp.ne.s32.totalorder %s302, %s305
      %p311 = scmp.eq.s32.totalorder %s23, 0
      %p312 = por %p310, %p311
      %p313 = scmp.ne.s32.totalorder %s302, %s305
      %p314 = scmp.eq.s32.totalorder %s28, 7
      %p315 = por %p313, %p314
      %p316 = scmp.ne.s32.totalorder %s305, %s306
      %p317 = scmp.eq.s32.totalorder %s28, 0
      %p318 = por %p316, %p317
      %p319 = scmp.ne.s32.totalorder %s305, %s306
      %p320 = scmp.eq.s32.totalorder %s29, 7
      %p321 = por %p319, %p320
      %p323 = scmp.ne.s32.totalorder %s306, %s322
      %p324 = scmp.eq.s32.totalorder %s29, 0
      %p325 = por %p323, %p324
      %p326 = scmp.le.s32.totalorder 1, %s23
      %p327 = scmp.lt.s32.totalorder %s23, 9
      %p328 = pnand %p326, %p327
      %p329 = pneg %p328
      // Predicated region
      $region9: #{tpu_custom_call.1} parent=5 // pred_check
        _
      $region10: #{tpu_custom_call.1} parent=5 // pred_check_branch
        %331 = sbr.rel (%p328) target = $region12
      $region11: #{tpu_custom_call.1} parent=5 // pred_region
        %s332 = ssub.s32 %s23, 1
        // Predicated region
        $region13: #{tpu_custom_call.1} parent=11 // pred_check
          %p333 = pneg %p264
        $region14: #{tpu_custom_call.1} parent=11 // pred_check_branch
          %335 = sbr.rel (%p333) target = $region16
        $region15: #{tpu_custom_call.1} parent=11 // pred_region
          _
        $region16: #{tpu_custom_call.1} parent=11 // pred_fallthru
          _
      $region12: #{tpu_custom_call.1} parent=5 // pred_fallthru
        _
      %p336 = scmp.lt.s32.totalorder %s23, 8
      // Predicated region
      $region17: #{tpu_custom_call.1} parent=5 // pred_check
        %p337 = pneg %p336
      $region18: #{tpu_custom_call.1} parent=5 // pred_check_branch
        %339 = sbr.rel (%p337) target = $region20
      $region19: #{tpu_custom_call.1} parent=5 // pred_region
        // Predicated region
        $region21: #{tpu_custom_call.1} parent=19 // pred_check
          %p340 = pneg %p55
        $region22: #{tpu_custom_call.1} parent=19 // pred_check_branch
          %342 = sbr.rel (%p340) target = $region24
        $region23: #{tpu_custom_call.1} parent=19 // pred_region
          %p343 = scmp.lt.s32.totalorder %s30, 1
          %s344 = scalar_select %p343, %s30, 1
          %s345 = smul.addr %s344, 4
          %s346 = scalar_lea.vmem %s0, %s345
        $region24: #{tpu_custom_call.1} parent=19 // pred_fallthru
          _
        // Predicated region
        $region25: #{tpu_custom_call.1} parent=19 // pred_check
          %p347 = pneg %p81
        $region26: #{tpu_custom_call.1} parent=19 // pred_check_branch
          %349 = sbr.rel (%p347) target = $region28
        $region27: #{tpu_custom_call.1} parent=19 // pred_region
          %p350 = scmp.lt.s32.totalorder %s31, 3
          %s351 = scalar_select %p350, %s31, 3
          %s352 = smul.addr %s351, 4
          %s353 = smul.addr %s352, 4
          %s354 = scalar_lea.vmem %s1, %s353
        $region28: #{tpu_custom_call.1} parent=19 // pred_fallthru
          _
        // Predicated region
        $region29: #{tpu_custom_call.1} parent=19 // pred_check
          %p355 = pneg %p107
        $region30: #{tpu_custom_call.1} parent=19 // pred_check_branch
          %357 = sbr.rel (%p355) target = $region32
        $region31: #{tpu_custom_call.1} parent=19 // pred_region
          %p358 = scmp.lt.s32.totalorder %s31, 3
          %s359 = scalar_select %p358, %s31, 3
          %s360 = smul.addr %s359, 4
          %s361 = smul.addr %s360, 4
          %s362 = scalar_lea.vmem %s2, %s361
        $region32: #{tpu_custom_call.1} parent=19 // pred_fallthru
          _
        // Predicated region
        $region33: #{tpu_custom_call.1} parent=19 // pred_check
          %p363 = pneg %p133
        $region34: #{tpu_custom_call.1} parent=19 // pred_check_branch
          %365 = sbr.rel (%p363) target = $region36
        $region35: #{tpu_custom_call.1} parent=19 // pred_region
          %p366 = scmp.lt.s32.totalorder %s31, 3
          %s367 = scalar_select %p366, %s31, 3
          %s368 = smul.addr %s367, 4
          %s369 = smul.addr %s368, 4
          %s370 = scalar_lea.vmem %s3, %s369
        $region36: #{tpu_custom_call.1} parent=19 // pred_fallthru
          _
        // Predicated region
        $region37: #{tpu_custom_call.1} parent=19 // pred_check
          %p371 = pneg %p159
        $region38: #{tpu_custom_call.1} parent=19 // pred_check_branch
          %373 = sbr.rel (%p371) target = $region40
        $region39: #{tpu_custom_call.1} parent=19 // pred_region
          %p374 = scmp.lt.s32.totalorder %s31, 3
          %s375 = scalar_select %p374, %s31, 3
          %s376 = scalar_lea.vmem %s4, %s375
        $region40: #{tpu_custom_call.1} parent=19 // pred_fallthru
          _
        // Predicated region
        $region41: #{tpu_custom_call.1} parent=19 // pred_check
          %p377 = pneg %p185
        $region42: #{tpu_custom_call.1} parent=19 // pred_check_branch
          %379 = sbr.rel (%p377) target = $region44
        $region43: #{tpu_custom_call.1} parent=19 // pred_region
          %p380 = scmp.lt.s32.totalorder %s31, 3
          %s381 = scalar_select %p380, %s31, 3
          %s382 = scalar_lea.vmem %s5, %s381
        $region44: #{tpu_custom_call.1} parent=19 // pred_fallthru
          _
        // Predicated region
        $region45: #{tpu_custom_call.1} parent=19 // pred_check
          %p383 = pneg %p211
        $region46: #{tpu_custom_call.1} parent=19 // pred_check_branch
          %385 = sbr.rel (%p383) target = $region48
        $region47: #{tpu_custom_call.1} parent=19 // pred_region
          %p386 = scmp.lt.s32.totalorder %s31, 3
          %s387 = scalar_select %p386, %s31, 3
          %s388 = scalar_lea.vmem %s6, %s387
        $region48: #{tpu_custom_call.1} parent=19 // pred_fallthru
          _
        // Predicated region
        $region49: #{tpu_custom_call.1} parent=19 // pred_check
          %p389 = pneg %p237
        $region50: #{tpu_custom_call.1} parent=19 // pred_check_branch
          %391 = sbr.rel (%p389) target = $region52
        $region51: #{tpu_custom_call.1} parent=19 // pred_region
          %p392 = scmp.lt.s32.totalorder %s31, 3
          %s393 = scalar_select %p392, %s31, 3
          %s394 = smul.addr %s393, 4
          %s395 = scalar_lea.vmem %s7, %s394
        $region52: #{tpu_custom_call.1} parent=19 // pred_fallthru
          _
      $region20: #{tpu_custom_call.1} parent=5 // pred_fallthru
        _
      %p396 = scmp.le.s32.totalorder 1, %s23
      %p397 = scmp.lt.s32.totalorder %s23, 9
      %p398 = pnand %p396, %p397
      %p399 = pneg %p398
      // Predicated region
      $region53: #{tpu_custom_call.1} parent=5 // pred_check
        _
      $region54: #{tpu_custom_call.1} parent=5 // pred_check_branch
        %401 = sbr.rel (%p398) target = $region56
      $region55: #{tpu_custom_call.1} parent=5 // pred_region
        %s402 = ssub.s32 %s23, 1
        %p403 = scmp.lt.s32.totalorder %s32, 1
        %s404 = scalar_select %p403, %s32, 1
        %s405 = smul.addr %s404, 4
        %s406 = scalar_lea.vmem %s0, %s405
        %p407 = pneg %p61
        %p408 = pneg %p58
        %p409 = scmp.lt.s32.totalorder %s33, 3
        %s410 = scalar_select %p409, %s33, 3
        %s411 = smul.addr %s410, 4
        %s412 = smul.addr %s411, 4
        %s413 = scalar_lea.vmem %s1, %s412
        %p414 = pneg %p87
        %p415 = pneg %p84
        %p416 = scmp.lt.s32.totalorder %s33, 3
        %s417 = scalar_select %p416, %s33, 3
        %s418 = smul.addr %s417, 4
        %s419 = smul.addr %s418, 4
        %s420 = scalar_lea.vmem %s2, %s419
        %p421 = pneg %p113
        %p422 = pneg %p110
        %p423 = scmp.lt.s32.totalorder %s33, 3
        %s424 = scalar_select %p423, %s33, 3
        %s425 = smul.addr %s424, 4
        %s426 = smul.addr %s425, 4
        %s427 = scalar_lea.vmem %s3, %s426
        %p428 = pneg %p139
        %p429 = pneg %p136
        %p430 = scmp.lt.s32.totalorder %s33, 3
        %s431 = scalar_select %p430, %s33, 3
        %s432 = scalar_lea.vmem %s4, %s431
        %p433 = pneg %p165
        %p434 = pneg %p162
        %p435 = scmp.lt.s32.totalorder %s33, 3
        %s436 = scalar_select %p435, %s33, 3
        %s437 = scalar_lea.vmem %s5, %s436
        %p438 = pneg %p191
        %p439 = pneg %p188
        %p440 = scmp.lt.s32.totalorder %s33, 3
        %s441 = scalar_select %p440, %s33, 3
        %s442 = scalar_lea.vmem %s6, %s441
        %p443 = pneg %p217
        %p444 = pneg %p214
        %p445 = scmp.lt.s32.totalorder %s33, 3
        %s446 = scalar_select %p445, %s33, 3
        %s447 = smul.addr %s446, 4
        %s448 = scalar_lea.vmem %s7, %s447
        %p449 = pneg %p243
        %p450 = pneg %p240
        %p451 = pneg %p264
        %p452 = pneg %p261
        %p453 = pneg %p290
        %p454 = pneg %p287
        %s455 = sand.u32 %s277, 1
        %s456 = scalar_lea.sflag [#allocation4], %s455
        %s457 = sand.u32 %s277, 1
        %s458 = smul.addr %s457, 8
        %s459 = scalar_lea.vmem [#allocation3], %s458
        %p460 = pneg %p318
        %p461 = pneg %p315
        %s462 = sand.u32 %s305, 1
        %s463 = scalar_lea.sflag [#allocation6], %s462
        %s464 = sand.u32 %s305, 1
        %s465 = smul.addr %s464, 8
        %s466 = scalar_lea.vmem [#allocation5], %s465
        %p467 = scmp.lt.s32.totalorder %s32, 1
        %s468 = scalar_select %p467, %s32, 1
        %s469 = smul.addr %s468, 4
        %s470 = scalar_lea.vmem %s0, %s469
        %p471 = scmp.lt.s32.totalorder %s33, 3
        %s472 = scalar_select %p471, %s33, 3
        %s473 = smul.addr %s472, 4
        %s474 = smul.addr %s473, 4
        %s475 = scalar_lea.vmem %s1, %s474
        %p476 = scmp.lt.s32.totalorder %s33, 3
        %s477 = scalar_select %p476, %s33, 3
        %s478 = smul.addr %s477, 4
        %s479 = smul.addr %s478, 4
        %s480 = scalar_lea.vmem %s2, %s479
        %p481 = scmp.lt.s32.totalorder %s33, 3
        %s482 = scalar_select %p481, %s33, 3
        %s483 = smul.addr %s482, 4
        %s484 = smul.addr %s483, 4
        %s485 = scalar_lea.vmem %s3, %s484
        %p486 = scmp.lt.s32.totalorder %s33, 3
        %s487 = scalar_select %p486, %s33, 3
        %s488 = scalar_lea.vmem %s4, %s487
        %p489 = scmp.lt.s32.totalorder %s33, 3
        %s490 = scalar_select %p489, %s33, 3
        %s491 = scalar_lea.vmem %s5, %s490
        %p492 = scmp.lt.s32.totalorder %s33, 3
        %s493 = scalar_select %p492, %s33, 3
        %s494 = scalar_lea.vmem %s6, %s493
        %p495 = scmp.lt.s32.totalorder %s33, 3
        %s496 = scalar_select %p495, %s33, 3
        %s497 = smul.addr %s496, 4
        %s498 = scalar_lea.vmem %s7, %s497
        %v500 = vld [vmem:[%s470] sm:$0xf]
        %p501 = scmp.eq.s32.totalorder %s33, 0
        // Predicated region
        $region57: #{tpu_custom_call.1} parent=55 // pred_check
          %p502 = pneg %p501
        $region58: #{tpu_custom_call.1} parent=55 // pred_check_branch
          %504 = sbr.rel (%p502) target = $region60
        $region59: #{tpu_custom_call.1} parent=55 // pred_region
          %v505 = vld [vmem:[%s8] sm:$0x1]
          %v507 = vlaneseq
          %v508 = vshrl.u32 %v507, 7
          %v509 = vsub.s32 0, %v508
          %v510 = vrot.slane %v505, %v509
          %vm512 = vcmask 261120
          %513 = vst.msk [vmem:[#allocation2] sm:$0xff] %vm512, %v510
        $region60: #{tpu_custom_call.1} parent=55 // pred_fallthru
          _
        %v514 = vld [vmem:[%s475] sm:$0xf]
        %v515 = vld [vmem:[%s475 + $0x4] sm:$0xf]
        %v516 = vld [vmem:[%s475 + $0x8] sm:$0xf]
        %v517 = vld [vmem:[%s475 + $0xc] sm:$0xf]
        %v518 = vld [vmem:[%s488] sm:$0x1]
        %v520 = vlaneseq
        %v521 = vshrl.u32 %v520, 7
        %v522 = vsub.s32 0, %v521
        %v523 = vrot.slane %v518, %v522
        %v529 = vunpack.c.l.b16 %v514
        %v530 = vunpack.c.l.b16 %v515
        %v531 = vunpack.c.l.b16 %v516
        %v532 = vunpack.c.l.b16 %v517
        %v533 = vpack.c.b16 %v530, %v529
        %v534 = vpack.c.b16 %v532, %v531
        %vm537 = vcmask 261120
        %v539 = vsel %vm537, %v500, 0
        %541 = vmatprep.subr.bf16.mxu0 0
        %542 = vmatpush1.bf16.msra.mxu0 %v533
        %543 = vmatprep.subr.bf16.mxu0 0
        %544 = vmatpush1.bf16.msra.mxu0 %v534
        %545 = vmatprep.subr.bf16.mxu0 0
        %546 = vmatpush1.bf16.msra.mxu0 0
        %547 = vmatprep.subr.bf16.mxu0 0
        %548 = vmatpush1.bf16.msra.mxu0 0
        %549 = vmatprep.subr.bf16.mxu0 0
        %550 = vmatpush1.bf16.msra.mxu0 0
        %551 = vmatprep.subr.bf16.mxu0 0
        %552 = vmatpush1.bf16.msra.mxu0 0
        %553 = vmatprep.subr.bf16.mxu0 0
        %554 = vmatpush1.bf16.msra.mxu0 0
        %555 = vmatprep.subr.bf16.mxu0 0
        %556 = vmatpush1.bf16.msra.mxu0 0
        %557 = vmatprep.subr.bf16.mxu0 0
        %558 = vmatpush1.bf16.msra.mxu0 0
        %559 = vmatprep.subr.bf16.mxu0 0
        %560 = vmatpush1.bf16.msra.mxu0 0
        %561 = vmatprep.subr.bf16.mxu0 0
        %562 = vmatpush1.bf16.msra.mxu0 0
        %563 = vmatprep.subr.bf16.mxu0 0
        %564 = vmatpush1.bf16.msra.mxu0 0
        %565 = vmatprep.subr.bf16.mxu0 0
        %566 = vmatpush1.bf16.msra.mxu0 0
        %567 = vmatprep.subr.bf16.mxu0 0
        %568 = vmatpush1.bf16.msra.mxu0 0
        %569 = vmatprep.subr.bf16.mxu0 0
        %570 = vmatpush1.bf16.msra.mxu0 0
        %571 = vmatprep.subr.bf16.mxu0 0
        %572 = vmatpush1.bf16.msra.mxu0 0
        %573 = vmatprep.mubr.bf16.mxu0 0
        %574 = vmatmul.mubr.bf16.gmra.mrb[0].mxu0 %v539
        %v575 = vpop.f32.mrb[0].mxu0
        %v576 = vadd.f32 %v523, %v575
        %v577 = vpop.f32.mrb[0].mxu0
        %v578 = vpop.f32.mrb[0].mxu0
        %v579 = vpop.f32.mrb[0].mxu0
        %580 = vdwg.mxu0
        %v581 = vld [vmem:[%s480] sm:$0xf]
        %v582 = vld [vmem:[%s480 + $0x4] sm:$0xf]
        %v583 = vld [vmem:[%s480 + $0x8] sm:$0xf]
        %v584 = vld [vmem:[%s480 + $0xc] sm:$0xf]
        %v585 = vld [vmem:[%s491] sm:$0x1]
        %v587 = vlaneseq
        %v588 = vshrl.u32 %v587, 7
        %v589 = vsub.s32 0, %v588
        %v590 = vrot.slane %v585, %v589
        %v596 = vunpack.c.l.b16 %v581
        %v597 = vunpack.c.l.b16 %v582
        %v598 = vunpack.c.l.b16 %v583
        %v599 = vunpack.c.l.b16 %v584
        %v600 = vpack.c.b16 %v597, %v596
        %v601 = vpack.c.b16 %v599, %v598
        %604 = vmatprep.subr.bf16.mxu0 0
        %605 = vmatpush1.bf16.msra.mxu0 %v600
        %606 = vmatprep.subr.bf16.mxu0 0
        %607 = vmatpush1.bf16.msra.mxu0 %v601
        %608 = vmatprep.subr.bf16.mxu0 0
        %609 = vmatpush1.bf16.msra.mxu0 0
        %610 = vmatprep.subr.bf16.mxu0 0
        %611 = vmatpush1.bf16.msra.mxu0 0
        %612 = vmatprep.subr.bf16.mxu0 0
        %613 = vmatpush1.bf16.msra.mxu0 0
        %614 = vmatprep.subr.bf16.mxu0 0
        %615 = vmatpush1.bf16.msra.mxu0 0
        %616 = vmatprep.subr.bf16.mxu0 0
        %617 = vmatpush1.bf16.msra.mxu0 0
        %618 = vmatprep.subr.bf16.mxu0 0
        %619 = vmatpush1.bf16.msra.mxu0 0
        %620 = vmatprep.subr.bf16.mxu0 0
        %621 = vmatpush1.bf16.msra.mxu0 0
        %622 = vmatprep.subr.bf16.mxu0 0
        %623 = vmatpush1.bf16.msra.mxu0 0
        %624 = vmatprep.subr.bf16.mxu0 0
        %625 = vmatpush1.bf16.msra.mxu0 0
        %626 = vmatprep.subr.bf16.mxu0 0
        %627 = vmatpush1.bf16.msra.mxu0 0
        %628 = vmatprep.subr.bf16.mxu0 0
        %629 = vmatpush1.bf16.msra.mxu0 0
        %630 = vmatprep.subr.bf16.mxu0 0
        %631 = vmatpush1.bf16.msra.mxu0 0
        %632 = vmatprep.subr.bf16.mxu0 0
        %633 = vmatpush1.bf16.msra.mxu0 0
        %634 = vmatprep.subr.bf16.mxu0 0
        %635 = vmatpush1.bf16.msra.mxu0 0
        %636 = vmatprep.mubr.bf16.mxu0 0
        %637 = vmatmul.mubr.bf16.gmra.mrb[0].mxu0 %v539
        %v638 = vpop.f32.mrb[0].mxu0
        %v639 = vadd.f32 %v590, %v638
        %v640 = vpop.f32.mrb[0].mxu0
        %v641 = vpop.f32.mrb[0].mxu0
        %v642 = vpop.f32.mrb[0].mxu0
        %643 = vdwg.mxu0
        %v644 = vld [vmem:[%s485] sm:$0xf]
        %v645 = vld [vmem:[%s485 + $0x4] sm:$0xf]
        %v646 = vld [vmem:[%s485 + $0x8] sm:$0xf]
        %v647 = vld [vmem:[%s485 + $0xc] sm:$0xf]
        %v648 = vld [vmem:[%s494] sm:$0x1]
        %v650 = vlaneseq
        %v651 = vshrl.u32 %v650, 7
        %v652 = vsub.s32 0, %v651
        %v653 = vrot.slane %v648, %v652
        %v659 = vunpack.c.l.b16 %v644
        %v660 = vunpack.c.l.b16 %v645
        %v661 = vunpack.c.l.b16 %v646
        %v662 = vunpack.c.l.b16 %v647
        %v663 = vpack.c.b16 %v660, %v659
        %v664 = vpack.c.b16 %v662, %v661
        %667 = vmatprep.subr.bf16.mxu0 0
        %668 = vmatpush1.bf16.msra.mxu0 %v663
        %669 = vmatprep.subr.bf16.mxu0 0
        %670 = vmatpush1.bf16.msra.mxu0 %v664
        %671 = vmatprep.subr.bf16.mxu0 0
        %672 = vmatpush1.bf16.msra.mxu0 0
        %673 = vmatprep.subr.bf16.mxu0 0
        %674 = vmatpush1.bf16.msra.mxu0 0
        %675 = vmatprep.subr.bf16.mxu0 0
        %676 = vmatpush1.bf16.msra.mxu0 0
        %677 = vmatprep.subr.bf16.mxu0 0
        %678 = vmatpush1.bf16.msra.mxu0 0
        %679 = vmatprep.subr.bf16.mxu0 0
        %680 = vmatpush1.bf16.msra.mxu0 0
        %681 = vmatprep.subr.bf16.mxu0 0
        %682 = vmatpush1.bf16.msra.mxu0 0
        %683 = vmatprep.subr.bf16.mxu0 0
        %684 = vmatpush1.bf16.msra.mxu0 0
        %685 = vmatprep.subr.bf16.mxu0 0
        %686 = vmatpush1.bf16.msra.mxu0 0
        %687 = vmatprep.subr.bf16.mxu0 0
        %688 = vmatpush1.bf16.msra.mxu0 0
        %689 = vmatprep.subr.bf16.mxu0 0
        %690 = vmatpush1.bf16.msra.mxu0 0
        %691 = vmatprep.subr.bf16.mxu0 0
        %692 = vmatpush1.bf16.msra.mxu0 0
        %693 = vmatprep.subr.bf16.mxu0 0
        %694 = vmatpush1.bf16.msra.mxu0 0
        %695 = vmatprep.subr.bf16.mxu0 0
        %696 = vmatpush1.bf16.msra.mxu0 0
        %697 = vmatprep.subr.bf16.mxu0 0
        %698 = vmatpush1.bf16.msra.mxu0 0
        %699 = vmatprep.mubr.bf16.mxu0 0
        %700 = vmatmul.mubr.bf16.gmra.mrb[0].mxu0 %v539
        %v701 = vpop.f32.mrb[0].mxu0
        %v702 = vadd.f32 %v653, %v701
        %v703 = vpop.f32.mrb[0].mxu0
        %v704 = vpop.f32.mrb[0].mxu0
        %v705 = vpop.f32.mrb[0].mxu0
        %706 = vdwg.mxu0
        %v707 = vpack.c.bf16 %v576, %v576
        %v708 = vpack.c.bf16 %v639, %v639
        %vm709 = vcmask 64512
        %v711 = vsel %vm709, %v707, 0
        %v714 = vsel %vm709, %v708, 0
        %716 = vmatprep.subr.bf16.mxu0 0
        %717 = vmatpush1.bf16.xpose.msra.mxu0 %v714
        %718 = vmatprep.subr.bf16.mxu0 0
        %719 = vmatpush1.bf16.xpose.msra.mxu0 0
        %720 = vmatprep.subr.bf16.mxu0 0
        %721 = vmatpush1.bf16.xpose.msra.mxu0 0
        %722 = vmatprep.subr.bf16.mxu0 0
        %723 = vmatpush1.bf16.xpose.msra.mxu0 0
        %724 = vmatprep.subr.bf16.mxu0 0
        %725 = vmatpush1.bf16.xpose.msra.mxu0 0
        %726 = vmatprep.subr.bf16.mxu0 0
        %727 = vmatpush1.bf16.xpose.msra.mxu0 0
        %728 = vmatprep.subr.bf16.mxu0 0
        %729 = vmatpush1.bf16.xpose.msra.mxu0 0
        %730 = vmatprep.subr.bf16.mxu0 0
        %731 = vmatpush1.bf16.xpose.msra.mxu0 0
        %732 = vmatprep.subr.bf16.mxu0 0
        %733 = vmatpush1.bf16.xpose.msra.mxu0 0
        %734 = vmatprep.subr.bf16.mxu0 0
        %735 = vmatpush1.bf16.xpose.msra.mxu0 0
        %736 = vmatprep.subr.bf16.mxu0 0
        %737 = vmatpush1.bf16.xpose.msra.mxu0 0
        %738 = vmatprep.subr.bf16.mxu0 0
        %739 = vmatpush1.bf16.xpose.msra.mxu0 0
        %740 = vmatprep.subr.bf16.mxu0 0
        %741 = vmatpush1.bf16.xpose.msra.mxu0 0
        %742 = vmatprep.subr.bf16.mxu0 0
        %743 = vmatpush1.bf16.xpose.msra.mxu0 0
        %744 = vmatprep.subr.bf16.mxu0 0
        %745 = vmatpush1.bf16.xpose.msra.mxu0 0
        %746 = vmatprep.subr.bf16.mxu0 0
        %747 = vmatpush1.bf16.xpose.msra.mxu0 0
        %748 = vmatprep.mubr.bf16.mxu0 0
        %749 = vmatmul.mubr.bf16.gmra.mrb[0].mxu0 %v711
        %v750 = vpop.f32.mrb[0].mxu0
        %v751 = vadd.f32 0.0, %v750
        %v752 = vpop.f32.mrb[0].mxu0
        %v753 = vpop.f32.mrb[0].mxu0
        %v754 = vpop.f32.mrb[0].mxu0
        %755 = vdwg.mxu0
        %v756 = vmul.f32 %v751, 0.35355338
        %v757 = vlaneseq
        %v758 = vshrl.u32 %v757, 7
        %v759 = vlaneseq
        %v760 = vand.u32 %v759, 127
        %vm761 = vcmp.ge.s32.totalorder %v758, %v760
        %v762 = vsel %vm761, %v756, -1e+30
        %v763 = vsel %vm709, %v762, -inf
        %764 = vmax.xlane.f32.xlu0 %v763
        %v765 = vpop.xlane.xlu0 %764
        %v766 = vsub.f32 %v762, %v765
        %v767 = vmul.f32 %v766, 1.442695
        %v768 = vpow.pop %v767
        %v769 = vsel %vm709, %v768, 0.0
        %770 = vadd.xlane.f32.xlu0 %v769
        %v771 = vpop.xlane.xlu0 %770
        %v772 = vrcp.pop %v771
        %v773 = vmul.f32 %v768, %v772
        %774 = vst.msk [vmem:[%s466] sm:$0xff] %vm709, %v773
        %v775 = vpack.c.bf16 %v773, %v773
        %v776 = vpack.c.bf16 %v702, %v702
        %v778 = vsel %vm709, %v775, 0
        %vm780 = vcmask 1043456
        %v782 = vsel %vm780, %v776, 0
        %784 = vmatprep.subr.bf16.mxu0 0
        %785 = vmatpush1.bf16.msra.mxu0 %v782
        %786 = vmatprep.subr.bf16.mxu0 0
        %787 = vmatpush1.bf16.msra.mxu0 0
        %788 = vmatprep.subr.bf16.mxu0 0
        %789 = vmatpush1.bf16.msra.mxu0 0
        %790 = vmatprep.subr.bf16.mxu0 0
        %791 = vmatpush1.bf16.msra.mxu0 0
        %792 = vmatprep.subr.bf16.mxu0 0
        %793 = vmatpush1.bf16.msra.mxu0 0
        %794 = vmatprep.subr.bf16.mxu0 0
        %795 = vmatpush1.bf16.msra.mxu0 0
        %796 = vmatprep.subr.bf16.mxu0 0
        %797 = vmatpush1.bf16.msra.mxu0 0
        %798 = vmatprep.subr.bf16.mxu0 0
        %799 = vmatpush1.bf16.msra.mxu0 0
        %800 = vmatprep.subr.bf16.mxu0 0
        %801 = vmatpush1.bf16.msra.mxu0 0
        %802 = vmatprep.subr.bf16.mxu0 0
        %803 = vmatpush1.bf16.msra.mxu0 0
        %804 = vmatprep.subr.bf16.mxu0 0
        %805 = vmatpush1.bf16.msra.mxu0 0
        %806 = vmatprep.subr.bf16.mxu0 0
        %807 = vmatpush1.bf16.msra.mxu0 0
        %808 = vmatprep.subr.bf16.mxu0 0
        %809 = vmatpush1.bf16.msra.mxu0 0
        %810 = vmatprep.subr.bf16.mxu0 0
        %811 = vmatpush1.bf16.msra.mxu0 0
        %812 = vmatprep.subr.bf16.mxu0 0
        %813 = vmatpush1.bf16.msra.mxu0 0
        %814 = vmatprep.subr.bf16.mxu0 0
        %815 = vmatpush1.bf16.msra.mxu0 0
        %816 = vmatprep.mubr.bf16.mxu0 0
        %817 = vmatmul.mubr.bf16.gmra.mrb[0].mxu0 %v778
        %v818 = vpop.f32.mrb[0].mxu0
        %v819 = vadd.f32 0.0, %v818
        %v820 = vpop.f32.mrb[0].mxu0
        %v821 = vpop.f32.mrb[0].mxu0
        %v822 = vpop.f32.mrb[0].mxu0
        %823 = vdwg.mxu0
        %v824 = vld [vmem:[#allocation2] sm:$0xff]
        %v825 = vpack.c.bf16 %v819, %v819
        %v826 = vld [vmem:[%s498] sm:$0xf]
        %v828 = vsel %vm709, %v825, 0
        %v831 = vsel %vm780, %v826, 0
        %833 = vmatprep.subr.bf16.mxu0 0
        %834 = vmatpush1.bf16.msra.mxu0 %v831
        %835 = vmatprep.subr.bf16.mxu0 0
        %836 = vmatpush1.bf16.msra.mxu0 0
        %837 = vmatprep.subr.bf16.mxu0 0
        %838 = vmatpush1.bf16.msra.mxu0 0
        %839 = vmatprep.subr.bf16.mxu0 0
        %840 = vmatpush1.bf16.msra.mxu0 0
        %841 = vmatprep.subr.bf16.mxu0 0
        %842 = vmatpush1.bf16.msra.mxu0 0
        %843 = vmatprep.subr.bf16.mxu0 0
        %844 = vmatpush1.bf16.msra.mxu0 0
        %845 = vmatprep.subr.bf16.mxu0 0
        %846 = vmatpush1.bf16.msra.mxu0 0
        %847 = vmatprep.subr.bf16.mxu0 0
        %848 = vmatpush1.bf16.msra.mxu0 0
        %849 = vmatprep.subr.bf16.mxu0 0
        %850 = vmatpush1.bf16.msra.mxu0 0
        %851 = vmatprep.subr.bf16.mxu0 0
        %852 = vmatpush1.bf16.msra.mxu0 0
        %853 = vmatprep.subr.bf16.mxu0 0
        %854 = vmatpush1.bf16.msra.mxu0 0
        %855 = vmatprep.subr.bf16.mxu0 0
        %856 = vmatpush1.bf16.msra.mxu0 0
        %857 = vmatprep.subr.bf16.mxu0 0
        %858 = vmatpush1.bf16.msra.mxu0 0
        %859 = vmatprep.subr.bf16.mxu0 0
        %860 = vmatpush1.bf16.msra.mxu0 0
        %861 = vmatprep.subr.bf16.mxu0 0
        %862 = vmatpush1.bf16.msra.mxu0 0
        %863 = vmatprep.subr.bf16.mxu0 0
        %864 = vmatpush1.bf16.msra.mxu0 0
        %865 = vmatprep.mubr.bf16.mxu0 0
        %866 = vmatmul.mubr.bf16.gmra.mrb[0].mxu0 %v828
        %v867 = vpop.f32.mrb[0].mxu0
        %v868 = vadd.f32 0.0, %v867
        %v869 = vpop.f32.mrb[0].mxu0
        %v870 = vpop.f32.mrb[0].mxu0
        %v871 = vpop.f32.mrb[0].mxu0
        %872 = vdwg.mxu0
        %v873 = vadd.f32 %v824, %v868
        %874 = vst.msk [vmem:[#allocation2] sm:$0xff] %vm537, %v873
        %p875 = scmp.eq.s32.totalorder %s33, 3
        // Predicated region
        $region61: #{tpu_custom_call.1} parent=55 // pred_check
          %p876 = pneg %p875
        $region62: #{tpu_custom_call.1} parent=55 // pred_check_branch
          %878 = sbr.rel (%p876) target = $region64
        $region63: #{tpu_custom_call.1} parent=55 // pred_region
          %v879 = vld [vmem:[#allocation2] sm:$0xff]
          %880 = vst.msk [vmem:[%s459] sm:$0xff] %vm537, %v879
        $region64: #{tpu_custom_call.1} parent=55 // pred_fallthru
          _
        %s881 = sand.u32 %s277, 1
        %s882 = scalar_lea.sflag [#allocation4], %s881
        %s883 = sand.u32 %s277, 1
        %s884 = smul.addr %s883, 8
        %s885 = scalar_lea.vmem [#allocation3], %s884
        %s886 = sand.u32 %s305, 1
        %s887 = scalar_lea.sflag [#allocation6], %s886
        %s888 = sand.u32 %s305, 1
        %s889 = smul.addr %s888, 8
        %s890 = scalar_lea.vmem [#allocation5], %s889
        // Predicated region
        $region65: #{tpu_custom_call.1} parent=55 // pred_check
          %p891 = pneg %p287
        $region66: #{tpu_custom_call.1} parent=55 // pred_check_branch
          %893 = sbr.rel (%p891) target = $region68
        $region67: #{tpu_custom_call.1} parent=55 // pred_region
          %s895 = ssub.s32 128, 128
          %896 = vsyncadd %s882, %s895
          %s897 = smul.addr %s32, 128
          %s898 = scalar_lea.hbm %s9, %s897
          %s900 = sshll.u32 %s885, 4
          %s901 = int_to_ptr.vmem [resolvable:$true] %s900
          %903 = dma.vmem_to_hbm [thread:$0]  %s901, 128, %s898, %s882
        $region68: #{tpu_custom_call.1} parent=55 // pred_fallthru
          _
        // Predicated region
        $region69: #{tpu_custom_call.1} parent=55 // pred_check
          %p904 = pneg %p315
        $region70: #{tpu_custom_call.1} parent=55 // pred_check_branch
          %906 = sbr.rel (%p904) target = $region72
        $region71: #{tpu_custom_call.1} parent=55 // pred_region
          %s908 = ssub.s32 128, 128
          %909 = vsyncadd %s887, %s908
          %s910 = smul.addr %s32, 4
          %s911 = sadd.s32 %s33, %s910
          %s912 = smul.addr %s911, 128
          %s913 = scalar_lea.hbm %s10, %s912
          %s915 = sshll.u32 %s890, 4
          %s916 = int_to_ptr.vmem [resolvable:$true] %s915
          %918 = dma.vmem_to_hbm [thread:$0]  %s916, 128, %s913, %s887
        $region72: #{tpu_custom_call.1} parent=55 // pred_fallthru
          _
      $region56: #{tpu_custom_call.1} parent=5 // pred_fallthru
        _
      %p919 = scmp.le.s32.totalorder 2, %s23
      // Predicated region
      $region73: #{tpu_custom_call.1} parent=5 // pred_check
        %p920 = pneg %p919
      $region74: #{tpu_custom_call.1} parent=5 // pred_check_branch
        %922 = sbr.rel (%p920) target = $region76
      $region75: #{tpu_custom_call.1} parent=5 // pred_region
        %s923 = ssub.s32 %s23, 2
        // Predicated region
        $region77: #{tpu_custom_call.1} parent=75 // pred_check
          %p924 = pneg %p293
        $region78: #{tpu_custom_call.1} parent=75 // pred_check_branch
          %926 = sbr.rel (%p924) target = $region80
        $region79: #{tpu_custom_call.1} parent=75 // pred_region
          %s927 = sand.u32 %s278, 1
          %s928 = scalar_lea.sflag [#allocation4], %s927
          %s929 = sand.u32 %s278, 1
          %s930 = smul.addr %s929, 8
          %s931 = scalar_lea.vmem [#allocation3], %s930
          %932 = dma.done %s928, 128
        $region80: #{tpu_custom_call.1} parent=75 // pred_fallthru
          _
        // Predicated region
        $region81: #{tpu_custom_call.1} parent=75 // pred_check
          %p933 = pneg %p321
        $region82: #{tpu_custom_call.1} parent=75 // pred_check_branch
          %935 = sbr.rel (%p933) target = $region84
        $region83: #{tpu_custom_call.1} parent=75 // pred_region
          %s936 = sand.u32 %s306, 1
          %s937 = scalar_lea.sflag [#allocation6], %s936
          %s938 = sand.u32 %s306, 1
          %s939 = smul.addr %s938, 8
          %s940 = scalar_lea.vmem [#allocation5], %s939
          %941 = dma.done %s937, 128
        $region84: #{tpu_custom_call.1} parent=75 // pred_fallthru
          _
      $region76: #{tpu_custom_call.1} parent=5 // pred_fallthru
        _
    $region6: #{tpu_custom_call.1} parent=1 // loop_footer
      %s27 = sadd.s32 1, %s23
    $region7: #{tpu_custom_call.1} parent=1 // loop_footer_branch
      %22 = sbr.rel target = $region3
    $region8: #{tpu_custom_call.1} parent=1 // loop_exit
      _
    %942 = vsyncpa [#allocation4], 1
    %s943 = scalar_lea.sflag [#allocation4], 1
    %944 = vsyncpa %s943, 1
    %945 = vsyncpa [#allocation6], 1
    %s946 = scalar_lea.sflag [#allocation6], 1
    %947 = vsyncpa %s946, 1

</llo_original>
